<compile_context>
chip_gen: v5e
topology: v5e:2x2
jax: 0.10.0
libtpu: 0.0.40
codegen_flags: <defaults>
</compile_context>

<pallas_src>
import jax
import jax.numpy as jnp
from jax.experimental import pallas as pl
from jax.experimental.pallas import tpu as pltpu


def _round_up(x, m):
    return ((x + m - 1) // m) * m


def _cdiv(a, b):
    return -(-a // b)


# ---------------------------------------------------------------------------
# Kernel: the whole 3-layer MLP for one batch tile.
# ---------------------------------------------------------------------------
def mlp_kernel(x_ref, w1_ref, b1_ref, w2_ref, b2_ref, w3_ref, b3_ref, o_ref):
    # x arrives f32 straight from HBM; downcast to bf16 here (hidden under the
    # tile DMA) instead of paying a separate XLA cast pass in the wrapper.
    x = x_ref[...].astype(jnp.bfloat16)

    # Layer 1: (TM, in_dim) bf16 @ (in_dim, H) bf16 -> f32 acc, +b, ReLU.
    h = jnp.dot(x, w1_ref[...], preferred_element_type=jnp.float32)
    h = jnp.maximum(h + b1_ref[...], 0.0).astype(jnp.bfloat16)

    # Layer 2: (TM, H) bf16 @ (H, H) bf16 -> f32 acc, +b, ReLU.
    h = jnp.dot(h, w2_ref[...], preferred_element_type=jnp.float32)
    h = jnp.maximum(h + b2_ref[...], 0.0).astype(jnp.bfloat16)

    # Output head: (TM, H) bf16 @ (H, 128) bf16 -> f32, +b, lane-dense store.
    out = jnp.dot(h, w3_ref[...], preferred_element_type=jnp.float32)
    o_ref[...] = (out + b3_ref[...]).astype(o_ref.dtype)


# ---------------------------------------------------------------------------
# One-time parameter preprocessing (do at init / checkpoint load, NOT per call).
# ---------------------------------------------------------------------------
def prepare_params(params):
    """Cast weights to bf16 and zero-pad the output head to 128 lanes.

    Weights must be (in_features, out_features) == torch nn.Linear.weight.T.
    """
    w1, b1, w2, b2, w3, b3 = params
    in_dim, hidden = w1.shape
    out_dim = w3.shape[1]
    assert w2.shape == (hidden, hidden), "w2 must be (hidden, hidden)"
    assert w3.shape[0] == hidden, "w3 must be (hidden, out_dim)"
    assert b1.size == hidden and b2.size == hidden and b3.size == out_dim

    # 128-lane pad of the head so the last matmul + store are lane-dense.
    n_pad = _round_up(max(out_dim, 128), 128)
    w3p = jnp.zeros((hidden, n_pad), jnp.float32).at[:, :out_dim].set(w3)
    b3p = jnp.zeros((1, n_pad), jnp.float32).at[:, :out_dim].set(
        jnp.asarray(b3, jnp.float32).reshape(1, out_dim))

    return dict(
        w1=jnp.asarray(w1, jnp.bfloat16),
        b1=jnp.asarray(b1, jnp.float32).reshape(1, hidden),
        w2=jnp.asarray(w2, jnp.bfloat16),
        b2=jnp.asarray(b2, jnp.float32).reshape(1, hidden),
        w3=w3p.astype(jnp.bfloat16),
        b3=b3p,
        in_dim=in_dim, hidden=hidden, out_dim=out_dim, n_pad=n_pad,
    )


def _pick_tm(batch):
    # Big tiles amortize the ~0.35 us per-grid-step cost; cap at 512 rows and
    # aim for >= 4 grid steps so v7x's two TensorCores each get >= 2 pipelined
    # steps.  16-row granularity matches bf16 sublane packing.
    tm = _round_up(max(1, _cdiv(batch, 4)), 16)
    return int(max(16, min(512, tm)))


# ---------------------------------------------------------------------------
# Forward wrapper.
# ---------------------------------------------------------------------------
def stable_mlp_forward(x_nchw, prep):
    in_dim = prep["in_dim"]
    hidden = prep["hidden"]
    out_dim = prep["out_dim"]
    n_pad = prep["n_pad"]

    B = x_nchw.shape[0]
    # Same element order as torch's .view(-1, in_dim) for contiguous NCHW.
    x2d = x_nchw.reshape(B, in_dim)          # stays f32; cast happens in-kernel

    TM = _pick_tm(B)
    grid = (_cdiv(B, TM),)                   # ragged last tile handled by Pallas

    const = lambda shape: pl.BlockSpec(shape, lambda i: (0, 0))  # VMEM-resident

    out = pl.pallas_call(
        mlp_kernel,
        out_shape=jax.ShapeDtypeStruct((B, n_pad), jnp.float32),
        grid=grid,
        in_specs=[
            pl.BlockSpec((TM, in_dim), lambda i: (i, 0)),   # pipelined x tiles
            const((in_dim, hidden)),
            const((1, hidden)),
            const((hidden, hidden)),
            const((1, hidden)),
            const((hidden, n_pad)),
            const((1, n_pad)),
        ],
        out_specs=pl.BlockSpec((TM, n_pad), lambda i: (i, 0)),
        compiler_params=pltpu.CompilerParams(
            dimension_semantics=("parallel",),   # megacore / v7x 2-TC sharding
            vmem_limit_bytes=32 << 20,           # real footprint is a few MiB
        ),
    )(x2d, prep["w1"], prep["b1"], prep["w2"], prep["b2"],
      prep["w3"], prep["b3"])

    # Only the cheap column slice remains (no batch padding -> no row slice).
    return out[:, :out_dim]


def init_params(key, in_dim, hidden, out_dim):
    # Deterministic init mimicking nn.Linear's U(-1/sqrt(fan_in), 1/sqrt(fan_in)).
    ks = jax.random.split(key, 6)

    def lin(kw, kb, fan_in, fan_out):
        bound = 1.0 / jnp.sqrt(fan_in)
        w = jax.random.uniform(kw, (fan_in, fan_out), jnp.float32, -bound, bound)
        b = jax.random.uniform(kb, (1, fan_out), jnp.float32, -bound, bound)
        return w, b

    w1, b1 = lin(ks[0], ks[1], in_dim, hidden)
    w2, b2 = lin(ks[2], ks[3], hidden, hidden)
    w3, b3 = lin(ks[4], ks[5], hidden, out_dim)
    return (w1, b1, w2, b2, w3, b3)


if __name__ == "__main__":
    # Module defaults: in_channel=1, img_sz=32 -> in_dim=1024, hidden=256, out=10.
    B, C, H, W = 2, 1, 32, 32
    in_dim = C * H * W
    hidden_dim = 256
    out_dim = 10

    key = jax.random.PRNGKey(0)
    kx, kp = jax.random.split(key)
    x = jax.random.normal(kx, (B, C, H, W), jnp.float32)
    params = init_params(kp, in_dim, hidden_dim, out_dim)

    prep = prepare_params(params)             # one-time: casts + head padding
    y = stable_mlp_forward(x, prep)
    y = jax.block_until_ready(y)

    # Pure-JAX reference with the same bf16-input / f32-accumulate precision.
    w1, b1, w2, b2, w3, b3 = params
    xb = x.reshape(B, in_dim).astype(jnp.bfloat16)
    ref = jnp.dot(xb, w1.astype(jnp.bfloat16), preferred_element_type=jnp.float32)
    ref = jnp.maximum(ref + b1, 0.0)
    ref = jnp.dot(ref.astype(jnp.bfloat16), w2.astype(jnp.bfloat16),
                  preferred_element_type=jnp.float32)
    ref = jnp.maximum(ref + b2, 0.0)
    ref = jnp.dot(ref.astype(jnp.bfloat16), w3.astype(jnp.bfloat16),
                  preferred_element_type=jnp.float32) + b3

    assert y.shape == (B, out_dim)
    assert jnp.allclose(y, ref, atol=1e-3, rtol=1e-3)

    print("KERNEL_OK")
</pallas_src>

<mosaic_0001>
module attributes {stable_mosaic.version = 11 : i64} {
  func.func @mlp_kernel(%arg0: i32, %arg1: memref<16x1024xf32, #tpu.memory_space<vmem>>, %arg2: memref<1024x256xbf16, #tpu.memory_space<vmem>>, %arg3: memref<1x256xf32, #tpu.memory_space<vmem>>, %arg4: memref<256x256xbf16, #tpu.memory_space<vmem>>, %arg5: memref<1x256xf32, #tpu.memory_space<vmem>>, %arg6: memref<256x128xbf16, #tpu.memory_space<vmem>>, %arg7: memref<1x128xf32, #tpu.memory_space<vmem>>, %arg8: memref<16x128xf32, #tpu.memory_space<vmem>>) attributes {dimension_semantics = [#tpu.dimension_semantics<parallel>], iteration_bounds = array<i64: 1>, scalar_prefetch = 0 : i64, scratch_operands = 0 : i64, tpu.core_type = #tpu.core_type<tc>, window_params = [{transform_indices = @transform_0, window_bounds = array<i64: 16, 1024>}, {pipeline_mode = #tpu.pipeline_mode<synchronous>, transform_indices = @transform_1, window_bounds = array<i64: 1024, 256>}, {pipeline_mode = #tpu.pipeline_mode<synchronous>, transform_indices = @transform_2, window_bounds = array<i64: 1, 256>}, {pipeline_mode = #tpu.pipeline_mode<synchronous>, transform_indices = @transform_3, window_bounds = array<i64: 256, 256>}, {pipeline_mode = #tpu.pipeline_mode<synchronous>, transform_indices = @transform_4, window_bounds = array<i64: 1, 256>}, {pipeline_mode = #tpu.pipeline_mode<synchronous>, transform_indices = @transform_5, window_bounds = array<i64: 256, 128>}, {pipeline_mode = #tpu.pipeline_mode<synchronous>, transform_indices = @transform_6, window_bounds = array<i64: 1, 128>}, {transform_indices = @transform_7, window_bounds = array<i64: 16, 128>}]} {
    %c0 = arith.constant 0 : index
    %c0_0 = arith.constant 0 : index
    %0 = vector.load %arg1[%c0, %c0_0] : memref<16x1024xf32, #tpu.memory_space<vmem>>, vector<16x1024xf32>
    %1 = arith.truncf %0 : vector<16x1024xf32> to vector<16x1024xbf16>
    %c0_1 = arith.constant 0 : index
    %c0_2 = arith.constant 0 : index
    %2 = vector.load %arg2[%c0_1, %c0_2] : memref<1024x256xbf16, #tpu.memory_space<vmem>>, vector<1024x256xbf16>
    %cst = arith.constant dense<0.000000e+00> : vector<16x256xf32>
    %3 = tpu.matmul %1, %2, %cst {dimension_numbers = #tpu.dot_dimension_numbers<[1], [0], [0], [1], [0, 0, 1, 1], [], []>} : vector<16x1024xbf16>, vector<1024x256xbf16>, vector<16x256xf32> -> vector<16x256xf32>
    %c0_3 = arith.constant 0 : index
    %c0_4 = arith.constant 0 : index
    %4 = vector.load %arg3[%c0_3, %c0_4] : memref<1x256xf32, #tpu.memory_space<vmem>>, vector<1x256xf32>
    %5 = vector.broadcast %4 : vector<1x256xf32> to vector<16x256xf32>
    %6 = arith.addf %3, %5 : vector<16x256xf32>
    %cst_5 = arith.constant 0.000000e+00 : f32
    %7 = vector.broadcast %cst_5 : f32 to vector<16x256xf32>
    %8 = arith.maximumf %6, %7 : vector<16x256xf32>
    %9 = arith.truncf %8 : vector<16x256xf32> to vector<16x256xbf16>
    %c0_6 = arith.constant 0 : index
    %c0_7 = arith.constant 0 : index
    %10 = vector.load %arg4[%c0_6, %c0_7] : memref<256x256xbf16, #tpu.memory_space<vmem>>, vector<256x256xbf16>
    %cst_8 = arith.constant dense<0.000000e+00> : vector<16x256xf32>
    %11 = tpu.matmul %9, %10, %cst_8 {dimension_numbers = #tpu.dot_dimension_numbers<[1], [0], [0], [1], [0, 0, 1, 1], [], []>} : vector<16x256xbf16>, vector<256x256xbf16>, vector<16x256xf32> -> vector<16x256xf32>
    %c0_9 = arith.constant 0 : index
    %c0_10 = arith.constant 0 : index
    %12 = vector.load %arg5[%c0_9, %c0_10] : memref<1x256xf32, #tpu.memory_space<vmem>>, vector<1x256xf32>
    %13 = vector.broadcast %12 : vector<1x256xf32> to vector<16x256xf32>
    %14 = arith.addf %11, %13 : vector<16x256xf32>
    %cst_11 = arith.constant 0.000000e+00 : f32
    %15 = vector.broadcast %cst_11 : f32 to vector<16x256xf32>
    %16 = arith.maximumf %14, %15 : vector<16x256xf32>
    %17 = arith.truncf %16 : vector<16x256xf32> to vector<16x256xbf16>
    %c0_12 = arith.constant 0 : index
    %c0_13 = arith.constant 0 : index
    %18 = vector.load %arg6[%c0_12, %c0_13] : memref<256x128xbf16, #tpu.memory_space<vmem>>, vector<256x128xbf16>
    %cst_14 = arith.constant dense<0.000000e+00> : vector<16x128xf32>
    %19 = tpu.matmul %17, %18, %cst_14 {dimension_numbers = #tpu.dot_dimension_numbers<[1], [0], [0], [1], [0, 0, 1, 1], [], []>} : vector<16x256xbf16>, vector<256x128xbf16>, vector<16x128xf32> -> vector<16x128xf32>
    %c0_15 = arith.constant 0 : index
    %c0_16 = arith.constant 0 : index
    %20 = vector.load %arg7[%c0_15, %c0_16] : memref<1x128xf32, #tpu.memory_space<vmem>>, vector<1x128xf32>
    %21 = vector.broadcast %20 : vector<1x128xf32> to vector<16x128xf32>
    %22 = arith.addf %19, %21 : vector<16x128xf32>
    %c0_17 = arith.constant 0 : index
    %c0_18 = arith.constant 0 : index
    %23 = vector.load %arg8[%c0_17, %c0_18] : memref<16x128xf32, #tpu.memory_space<vmem>>, vector<16x128xf32>
    tpu.vector_store %arg8[%c0_17, %c0_18], %22 {strides = array<i32>} : memref<16x128xf32, #tpu.memory_space<vmem>>, vector<16x128xf32>,
    return
  }
  func.func @transform_0(%arg0: i32) -> (i32, i32) {
    %c0_i32 = arith.constant 0 : i32
    %c0_i32_0 = arith.constant 0 : i32
    return %arg0, %c0_i32 : i32, i32
  }
  func.func @transform_1(%arg0: i32) -> (i32, i32) {
    %c0_i32 = arith.constant 0 : i32
    %c0_i32_0 = arith.constant 0 : i32
    %c0_i32_1 = arith.constant 0 : i32
    return %c0_i32, %c0_i32_0 : i32, i32
  }
  func.func @transform_2(%arg0: i32) -> (i32, i32) {
    %c0_i32 = arith.constant 0 : i32
    %c0_i32_0 = arith.constant 0 : i32
    %c0_i32_1 = arith.constant 0 : i32
    return %c0_i32, %c0_i32_0 : i32, i32
  }
  func.func @transform_3(%arg0: i32) -> (i32, i32) {
    %c0_i32 = arith.constant 0 : i32
    %c0_i32_0 = arith.constant 0 : i32
    %c0_i32_1 = arith.constant 0 : i32
    return %c0_i32, %c0_i32_0 : i32, i32
  }
  func.func @transform_4(%arg0: i32) -> (i32, i32) {
    %c0_i32 = arith.constant 0 : i32
    %c0_i32_0 = arith.constant 0 : i32
    %c0_i32_1 = arith.constant 0 : i32
    return %c0_i32, %c0_i32_0 : i32, i32
  }
  func.func @transform_5(%arg0: i32) -> (i32, i32) {
    %c0_i32 = arith.constant 0 : i32
    %c0_i32_0 = arith.constant 0 : i32
    %c0_i32_1 = arith.constant 0 : i32
    return %c0_i32, %c0_i32_0 : i32, i32
  }
  func.func @transform_6(%arg0: i32) -> (i32, i32) {
    %c0_i32 = arith.constant 0 : i32
    %c0_i32_0 = arith.constant 0 : i32
    %c0_i32_1 = arith.constant 0 : i32
    return %c0_i32, %c0_i32_0 : i32, i32
  }
  func.func @transform_7(%arg0: i32) -> (i32, i32) {
    %c0_i32 = arith.constant 0 : i32
    %c0_i32_0 = arith.constant 0 : i32
    return %arg0, %c0_i32 : i32, i32
  }
}

</mosaic_0001>

<llo_original>
// kernel: tpu_custom_call.1
$region0: #{tpu_custom_call.1}
  #allocation0 [shape = 'u32[]', space=smem, size = 0x4, offset = 0x4, fixed_abs, tag = 'smem constant byte address 0x4 - core index']
  #allocation1 [shape = 'u32[72,128]{1,0:T(1,128)}', space=vmem, size = 0x9000, scoped, tag = 'internal scratch']
  %s0 = inlined_call_operand.hbm [shape: f32[2,1024], index: 0, kind: input, shape index: {}]
  %s1 = inlined_call_operand.hbm [shape: bf16[1024,256], index: 1, kind: input, shape index: {}]
  %s2 = inlined_call_operand.hbm [shape: f32[1,256], index: 2, kind: input, shape index: {}]
  %s3 = inlined_call_operand.hbm [shape: bf16[256,256], index: 3, kind: input, shape index: {}]
  %s4 = inlined_call_operand.vmem [shape: f32[1,256], index: 4, kind: input, shape index: {}]
  %s5 = inlined_call_operand.hbm [shape: bf16[256,128], index: 5, kind: input, shape index: {}]
  %s6 = inlined_call_operand.vmem [shape: f32[1,128], index: 6, kind: input, shape index: {}]
  %s7 = inlined_call_operand.hbm [shape: f32[2,128], index: 7, kind: output, shape index: {}]
  %s8 = sld [smem:[#allocation0]]
  $region58: #{tpu_custom_call.1} parent=0
    _
  %s10 = ssub.s32 1, %s8
  %s11 = scalar_select 0, %s10, %s8
  $region1: #{tpu_custom_call.1} parent=0
    #allocation2 [shape = 'u8[65536]{0}', space=vmem, size = 0x10000, scoped, tag = 'input window, operand 0, single buffered']
    #allocation3 [shape = 's32[1]{0}', space=sflag, size = 0x4, scoped, tag = 'scoped memory for tpu_custom_call.1']
    #allocation4 [shape = 's32[1]{0}', space=sflag, size = 0x4, scoped, tag = 'scoped memory for tpu_custom_call.1']
    #allocation5 [shape = 'u8[524288]{0}', space=vmem, size = 0x80000, scoped, tag = 'input window, operand 1, single buffered']
    #allocation6 [shape = 's32[1]{0}', space=sflag, size = 0x4, scoped, tag = 'scoped memory for tpu_custom_call.1']
    #allocation7 [shape = 'u8[1024]{0}', space=vmem, size = 0x400, scoped, tag = 'input window, operand 2, single buffered']
    #allocation8 [shape = 'u8[131072]{0}', space=vmem, size = 0x20000, scoped, tag = 'input window, operand 3, single buffered']
    #allocation9 [shape = 's32[1]{0}', space=sflag, size = 0x4, scoped, tag = 'scoped memory for tpu_custom_call.1']
    #allocation10 [shape = 'u8[65536]{0}', space=vmem, size = 0x10000, scoped, tag = 'input window, operand 5, single buffered']
    #allocation11 [shape = 'u8[8192]{0}', space=vmem, size = 0x2000, scoped, tag = 'output window, operand 0, single buffered']
    %12 = vsyncpa [#allocation3], 0
    %13 = vsyncpa [#allocation6], 0
    %14 = vsyncpa [#allocation9], 0
    %15 = vsyncpa [#allocation4], 0
    // Predicated region
    $region2: #{tpu_custom_call.1} parent=1 // pred_check
      _
    $region3: #{tpu_custom_call.1} parent=1 // pred_check_branch
      %17 = sbr.rel (0) target = $region5
    $region4: #{tpu_custom_call.1} parent=1 // pred_region
      %19 = vsyncadd [#allocation3], 1792
      %s20 = sshll.u32 %s0, 4
      %s21 = int_to_ptr.hbm [resolvable:$true] %s20
      %s22 = sshll.u32 [#allocation2], 4
      %s23 = int_to_ptr.vmem [resolvable:$true] %s22
      %28 = dma.hbm_to_vmem [thread:$0]  %s21, 256, %s23, [#allocation3], 256, 256, 16
    $region5: #{tpu_custom_call.1} parent=1 // pred_fallthru
      _
    // Predicated region
    $region6: #{tpu_custom_call.1} parent=1 // pred_check
      _
    $region7: #{tpu_custom_call.1} parent=1 // pred_check_branch
      %30 = sbr.rel (0) target = $region9
    $region8: #{tpu_custom_call.1} parent=1 // pred_region
      %32 = vsyncadd [#allocation6], 0
      %s33 = sshll.u32 %s1, 4
      %s34 = int_to_ptr.hbm [resolvable:$true] %s33
      %s35 = sshll.u32 [#allocation5], 4
      %s36 = int_to_ptr.vmem [resolvable:$true] %s35
      %41 = dma.hbm_to_vmem [thread:$0]  %s34, 16384, %s36, [#allocation6], 128, 128, 8
    $region9: #{tpu_custom_call.1} parent=1 // pred_fallthru
      _
    // Predicated region
    $region10: #{tpu_custom_call.1} parent=1 // pred_check
      _
    $region11: #{tpu_custom_call.1} parent=1 // pred_check_branch
      %43 = sbr.rel (0) target = $region13
    $region12: #{tpu_custom_call.1} parent=1 // pred_region
      %45 = vsyncadd [#allocation6], 0
      %s47 = sshll.u32 %s2, 4
      %s48 = int_to_ptr.hbm [resolvable:$true] %s47
      %s49 = sshll.u32 [#allocation7], 4
      %s50 = int_to_ptr.vmem [resolvable:$true] %s49
      %52 = dma.hbm_to_vmem [thread:$0]  %s48, 32, %s50, [#allocation6]
    $region13: #{tpu_custom_call.1} parent=1 // pred_fallthru
      _
    // Predicated region
    $region14: #{tpu_custom_call.1} parent=1 // pred_check
      _
    $region15: #{tpu_custom_call.1} parent=1 // pred_check_branch
      %54 = sbr.rel (0) target = $region17
    $region16: #{tpu_custom_call.1} parent=1 // pred_region
      %56 = vsyncadd [#allocation9], 0
      %s57 = sshll.u32 %s3, 4
      %s58 = int_to_ptr.hbm [resolvable:$true] %s57
      %s59 = sshll.u32 [#allocation8], 4
      %s60 = int_to_ptr.vmem [resolvable:$true] %s59
      %65 = dma.hbm_to_vmem [thread:$0]  %s58, 4096, %s60, [#allocation9], 128, 128, 8
    $region17: #{tpu_custom_call.1} parent=1 // pred_fallthru
      _
    // Predicated region
    $region18: #{tpu_custom_call.1} parent=1 // pred_check
      _
    $region19: #{tpu_custom_call.1} parent=1 // pred_check_branch
      %67 = sbr.rel (0) target = $region21
    $region20: #{tpu_custom_call.1} parent=1 // pred_region
      _
    $region21: #{tpu_custom_call.1} parent=1 // pred_fallthru
      _
    // Predicated region
    $region22: #{tpu_custom_call.1} parent=1 // pred_check
      _
    $region23: #{tpu_custom_call.1} parent=1 // pred_check_branch
      %69 = sbr.rel (0) target = $region25
    $region24: #{tpu_custom_call.1} parent=1 // pred_region
      %71 = vsyncadd [#allocation9], 0
      %s72 = sshll.u32 %s5, 4
      %s73 = int_to_ptr.hbm [resolvable:$true] %s72
      %s74 = sshll.u32 [#allocation10], 4
      %s75 = int_to_ptr.vmem [resolvable:$true] %s74
      %80 = dma.hbm_to_vmem [thread:$0]  %s73, 2048, %s75, [#allocation9], 64, 64, 4
    $region25: #{tpu_custom_call.1} parent=1 // pred_fallthru
      _
    // Predicated region
    $region26: #{tpu_custom_call.1} parent=1 // pred_check
      _
    $region27: #{tpu_custom_call.1} parent=1 // pred_check_branch
      %82 = sbr.rel (0) target = $region29
    $region28: #{tpu_custom_call.1} parent=1 // pred_region
      _
    $region29: #{tpu_custom_call.1} parent=1 // pred_fallthru
      _
    // Predicated region
    $region30: #{tpu_custom_call.1} parent=1 // pred_check
      _
    $region31: #{tpu_custom_call.1} parent=1 // pred_check_branch
      %84 = sbr.rel (0) target = $region33
    $region32: #{tpu_custom_call.1} parent=1 // pred_region
      %86 = dma.done [#allocation3], 2048
    $region33: #{tpu_custom_call.1} parent=1 // pred_fallthru
      _
    // Predicated region
    $region34: #{tpu_custom_call.1} parent=1 // pred_check
      _
    $region35: #{tpu_custom_call.1} parent=1 // pred_check_branch
      %88 = sbr.rel (0) target = $region37
    $region36: #{tpu_custom_call.1} parent=1 // pred_region
      %90 = dma.done [#allocation6], 16384
    $region37: #{tpu_custom_call.1} parent=1 // pred_fallthru
      _
    // Predicated region
    $region38: #{tpu_custom_call.1} parent=1 // pred_check
      _
    $region39: #{tpu_custom_call.1} parent=1 // pred_check_branch
      %92 = sbr.rel (0) target = $region41
    $region40: #{tpu_custom_call.1} parent=1 // pred_region
      %94 = dma.done [#allocation6], 32
    $region41: #{tpu_custom_call.1} parent=1 // pred_fallthru
      _
    // Predicated region
    $region42: #{tpu_custom_call.1} parent=1 // pred_check
      _
    $region43: #{tpu_custom_call.1} parent=1 // pred_check_branch
      %96 = sbr.rel (0) target = $region45
    $region44: #{tpu_custom_call.1} parent=1 // pred_region
      %98 = dma.done [#allocation9], 4096
    $region45: #{tpu_custom_call.1} parent=1 // pred_fallthru
      _
    // Predicated region
    $region46: #{tpu_custom_call.1} parent=1 // pred_check
      _
    $region47: #{tpu_custom_call.1} parent=1 // pred_check_branch
      %100 = sbr.rel (0) target = $region49
    $region48: #{tpu_custom_call.1} parent=1 // pred_region
      %102 = dma.done [#allocation9], 2048
    $region49: #{tpu_custom_call.1} parent=1 // pred_fallthru
      _
    %v103 = vld [vmem:[#allocation2] sm:$0xff]
    %v104 = vld [vmem:[#allocation2 + $0x8] sm:$0xff]
    %v105 = vld [vmem:[#allocation2 + $0x10] sm:$0xff]
    %v106 = vld [vmem:[#allocation2 + $0x18] sm:$0xff]
    %v107 = vld [vmem:[#allocation2 + $0x20] sm:$0xff]
    %v108 = vld [vmem:[#allocation2 + $0x28] sm:$0xff]
    %v109 = vld [vmem:[#allocation2 + $0x30] sm:$0xff]
    %v110 = vld [vmem:[#allocation2 + $0x38] sm:$0xff]
    %v111 = vld [vmem:[#allocation2 + $0x40] sm:$0xff]
    %v112 = vld [vmem:[#allocation2 + $0x48] sm:$0xff]
    %v113 = vld [vmem:[#allocation2 + $0x50] sm:$0xff]
    %v114 = vld [vmem:[#allocation2 + $0x58] sm:$0xff]
    %v115 = vld [vmem:[#allocation2 + $0x60] sm:$0xff]
    %v116 = vld [vmem:[#allocation2 + $0x68] sm:$0xff]
    %v117 = vld [vmem:[#allocation2 + $0x70] sm:$0xff]
    %v118 = vld [vmem:[#allocation2 + $0x78] sm:$0xff]
    %135 = vst [vmem:[#allocation1] ss:$4 sm:$0xff] %v103
    %s136 = scalar_lea.vmem [#allocation1], 1
    %137 = vst [vmem:[%s136] ss:$4 sm:$0xff] %v105
    %s138 = scalar_lea.vmem [#allocation1], 2
    %139 = vst [vmem:[%s138] ss:$4 sm:$0xff] %v107
    %s140 = scalar_lea.vmem [#allocation1], 3
    %141 = vst [vmem:[%s140] ss:$4 sm:$0xff] %v109
    %s142 = scalar_lea.vmem [#allocation1], 32
    %143 = vst [vmem:[%s142] ss:$4 sm:$0xff] %v104
    %s144 = scalar_lea.vmem [#allocation1], 33
    %145 = vst [vmem:[%s144] ss:$4 sm:$0xff] %v106
    %s146 = scalar_lea.vmem [#allocation1], 34
    %147 = vst [vmem:[%s146] ss:$4 sm:$0xff] %v108
    %s148 = scalar_lea.vmem [#allocation1], 35
    %149 = vst [vmem:[%s148] ss:$4 sm:$0xff] %v110
    %v150 = vld.sshfl [vmem:[#allocation1] sm:$0xff pattern:$0x73625140]
    %v151 = vld.sshfl [vmem:[#allocation1 + $0x8] sm:$0xff pattern:$0x73625140]
    %v152 = vld.sshfl [vmem:[#allocation1 + $0x10] sm:$0xff pattern:$0x73625140]
    %v153 = vld.sshfl [vmem:[#allocation1 + $0x18] sm:$0xff pattern:$0x73625140]
    %v154 = vld.sshfl [vmem:[#allocation1 + $0x20] sm:$0xff pattern:$0x73625140]
    %v155 = vld.sshfl [vmem:[#allocation1 + $0x28] sm:$0xff pattern:$0x73625140]
    %v156 = vld.sshfl [vmem:[#allocation1 + $0x30] sm:$0xff pattern:$0x73625140]
    %v157 = vld.sshfl [vmem:[#allocation1 + $0x38] sm:$0xff pattern:$0x73625140]
    %158 = vst [vmem:[#allocation1] ss:$4 sm:$0xff] %v111
    %159 = vst [vmem:[%s136] ss:$4 sm:$0xff] %v113
    %160 = vst [vmem:[%s138] ss:$4 sm:$0xff] %v115
    %161 = vst [vmem:[%s140] ss:$4 sm:$0xff] %v117
    %162 = vst [vmem:[%s142] ss:$4 sm:$0xff] %v112
    %163 = vst [vmem:[%s144] ss:$4 sm:$0xff] %v114
    %164 = vst [vmem:[%s146] ss:$4 sm:$0xff] %v116
    %165 = vst [vmem:[%s148] ss:$4 sm:$0xff] %v118
    %v166 = vld.sshfl [vmem:[#allocation1] sm:$0xff pattern:$0x73625140]
    %v167 = vld.sshfl [vmem:[#allocation1 + $0x8] sm:$0xff pattern:$0x73625140]
    %v168 = vld.sshfl [vmem:[#allocation1 + $0x10] sm:$0xff pattern:$0x73625140]
    %v169 = vld.sshfl [vmem:[#allocation1 + $0x18] sm:$0xff pattern:$0x73625140]
    %v170 = vld.sshfl [vmem:[#allocation1 + $0x20] sm:$0xff pattern:$0x73625140]
    %v171 = vld.sshfl [vmem:[#allocation1 + $0x28] sm:$0xff pattern:$0x73625140]
    %v172 = vld.sshfl [vmem:[#allocation1 + $0x30] sm:$0xff pattern:$0x73625140]
    %v173 = vld.sshfl [vmem:[#allocation1 + $0x38] sm:$0xff pattern:$0x73625140]
    %v190 = vpack.c.bf16 %v166, %v150
    %v191 = vpack.c.bf16 %v167, %v151
    %v192 = vpack.c.bf16 %v168, %v152
    %v193 = vpack.c.bf16 %v169, %v153
    %v194 = vpack.c.bf16 %v170, %v154
    %v195 = vpack.c.bf16 %v171, %v155
    %v196 = vpack.c.bf16 %v172, %v156
    %v197 = vpack.c.bf16 %v173, %v157
    %v198 = vld [vmem:[#allocation5] sm:$0xff]
    %v199 = vld [vmem:[#allocation5 + $0x8] sm:$0xff]
    %v200 = vld [vmem:[#allocation5 + $0x10] sm:$0xff]
    %v201 = vld [vmem:[#allocation5 + $0x18] sm:$0xff]
    %v202 = vld [vmem:[#allocation5 + $0x20] sm:$0xff]
    %v203 = vld [vmem:[#allocation5 + $0x28] sm:$0xff]
    %v204 = vld [vmem:[#allocation5 + $0x30] sm:$0xff]
    %v205 = vld [vmem:[#allocation5 + $0x38] sm:$0xff]
    %v206 = vld [vmem:[#allocation5 + $0x40] sm:$0xff]
    %v207 = vld [vmem:[#allocation5 + $0x48] sm:$0xff]
    %v208 = vld [vmem:[#allocation5 + $0x50] sm:$0xff]
    %v209 = vld [vmem:[#allocation5 + $0x58] sm:$0xff]
    %v210 = vld [vmem:[#allocation5 + $0x60] sm:$0xff]
    %v211 = vld [vmem:[#allocation5 + $0x68] sm:$0xff]
    %v212 = vld [vmem:[#allocation5 + $0x70] sm:$0xff]
    %v213 = vld [vmem:[#allocation5 + $0x78] sm:$0xff]
    %v214 = vld [vmem:[#allocation5 + $0x80] sm:$0xff]
    %v215 = vld [vmem:[#allocation5 + $0x88] sm:$0xff]
    %v216 = vld [vmem:[#allocation5 + $0x90] sm:$0xff]
    %v217 = vld [vmem:[#allocation5 + $0x98] sm:$0xff]
    %v218 = vld [vmem:[#allocation5 + $0xa0] sm:$0xff]
    %v219 = vld [vmem:[#allocation5 + $0xa8] sm:$0xff]
    %v220 = vld [vmem:[#allocation5 + $0xb0] sm:$0xff]
    %v221 = vld [vmem:[#allocation5 + $0xb8] sm:$0xff]
    %v222 = vld [vmem:[#allocation5 + $0xc0] sm:$0xff]
    %v223 = vld [vmem:[#allocation5 + $0xc8] sm:$0xff]
    %v224 = vld [vmem:[#allocation5 + $0xd0] sm:$0xff]
    %v225 = vld [vmem:[#allocation5 + $0xd8] sm:$0xff]
    %v226 = vld [vmem:[#allocation5 + $0xe0] sm:$0xff]
    %v227 = vld [vmem:[#allocation5 + $0xe8] sm:$0xff]
    %v228 = vld [vmem:[#allocation5 + $0xf0] sm:$0xff]
    %v229 = vld [vmem:[#allocation5 + $0xf8] sm:$0xff]
    %v230 = vld [vmem:[#allocation5 + $0x100] sm:$0xff]
    %v231 = vld [vmem:[#allocation5 + $0x108] sm:$0xff]
    %v232 = vld [vmem:[#allocation5 + $0x110] sm:$0xff]
    %v233 = vld [vmem:[#allocation5 + $0x118] sm:$0xff]
    %v234 = vld [vmem:[#allocation5 + $0x120] sm:$0xff]
    %v235 = vld [vmem:[#allocation5 + $0x128] sm:$0xff]
    %v236 = vld [vmem:[#allocation5 + $0x130] sm:$0xff]
    %v237 = vld [vmem:[#allocation5 + $0x138] sm:$0xff]
    %v238 = vld [vmem:[#allocation5 + $0x140] sm:$0xff]
    %v239 = vld [vmem:[#allocation5 + $0x148] sm:$0xff]
    %v240 = vld [vmem:[#allocation5 + $0x150] sm:$0xff]
    %v241 = vld [vmem:[#allocation5 + $0x158] sm:$0xff]
    %v242 = vld [vmem:[#allocation5 + $0x160] sm:$0xff]
    %v243 = vld [vmem:[#allocation5 + $0x168] sm:$0xff]
    %v244 = vld [vmem:[#allocation5 + $0x170] sm:$0xff]
    %v245 = vld [vmem:[#allocation5 + $0x178] sm:$0xff]
    %v246 = vld [vmem:[#allocation5 + $0x180] sm:$0xff]
    %v247 = vld [vmem:[#allocation5 + $0x188] sm:$0xff]
    %v248 = vld [vmem:[#allocation5 + $0x190] sm:$0xff]
    %v249 = vld [vmem:[#allocation5 + $0x198] sm:$0xff]
    %v250 = vld [vmem:[#allocation5 + $0x1a0] sm:$0xff]
    %v251 = vld [vmem:[#allocation5 + $0x1a8] sm:$0xff]
    %v252 = vld [vmem:[#allocation5 + $0x1b0] sm:$0xff]
    %v253 = vld [vmem:[#allocation5 + $0x1b8] sm:$0xff]
    %v254 = vld [vmem:[#allocation5 + $0x1c0] sm:$0xff]
    %v255 = vld [vmem:[#allocation5 + $0x1c8] sm:$0xff]
    %v256 = vld [vmem:[#allocation5 + $0x1d0] sm:$0xff]
    %v257 = vld [vmem:[#allocation5 + $0x1d8] sm:$0xff]
    %v258 = vld [vmem:[#allocation5 + $0x1e0] sm:$0xff]
    %v259 = vld [vmem:[#allocation5 + $0x1e8] sm:$0xff]
    %v260 = vld [vmem:[#allocation5 + $0x1f0] sm:$0xff]
    %v261 = vld [vmem:[#allocation5 + $0x1f8] sm:$0xff]
    %v262 = vld [vmem:[#allocation5 + $0x200] sm:$0xff]
    %v263 = vld [vmem:[#allocation5 + $0x208] sm:$0xff]
    %v264 = vld [vmem:[#allocation5 + $0x210] sm:$0xff]
    %v265 = vld [vmem:[#allocation5 + $0x218] sm:$0xff]
    %v266 = vld [vmem:[#allocation5 + $0x220] sm:$0xff]
    %v267 = vld [vmem:[#allocation5 + $0x228] sm:$0xff]
    %v268 = vld [vmem:[#allocation5 + $0x230] sm:$0xff]
    %v269 = vld [vmem:[#allocation5 + $0x238] sm:$0xff]
    %v270 = vld [vmem:[#allocation5 + $0x240] sm:$0xff]
    %v271 = vld [vmem:[#allocation5 + $0x248] sm:$0xff]
    %v272 = vld [vmem:[#allocation5 + $0x250] sm:$0xff]
    %v273 = vld [vmem:[#allocation5 + $0x258] sm:$0xff]
    %v274 = vld [vmem:[#allocation5 + $0x260] sm:$0xff]
    %v275 = vld [vmem:[#allocation5 + $0x268] sm:$0xff]
    %v276 = vld [vmem:[#allocation5 + $0x270] sm:$0xff]
    %v277 = vld [vmem:[#allocation5 + $0x278] sm:$0xff]
    %v278 = vld [vmem:[#allocation5 + $0x280] sm:$0xff]
    %v279 = vld [vmem:[#allocation5 + $0x288] sm:$0xff]
    %v280 = vld [vmem:[#allocation5 + $0x290] sm:$0xff]
    %v281 = vld [vmem:[#allocation5 + $0x298] sm:$0xff]
    %v282 = vld [vmem:[#allocation5 + $0x2a0] sm:$0xff]
    %v283 = vld [vmem:[#allocation5 + $0x2a8] sm:$0xff]
    %v284 = vld [vmem:[#allocation5 + $0x2b0] sm:$0xff]
    %v285 = vld [vmem:[#allocation5 + $0x2b8] sm:$0xff]
    %v286 = vld [vmem:[#allocation5 + $0x2c0] sm:$0xff]
    %v287 = vld [vmem:[#allocation5 + $0x2c8] sm:$0xff]
    %v288 = vld [vmem:[#allocation5 + $0x2d0] sm:$0xff]
    %v289 = vld [vmem:[#allocation5 + $0x2d8] sm:$0xff]
    %v290 = vld [vmem:[#allocation5 + $0x2e0] sm:$0xff]
    %v291 = vld [vmem:[#allocation5 + $0x2e8] sm:$0xff]
    %v292 = vld [vmem:[#allocation5 + $0x2f0] sm:$0xff]
    %v293 = vld [vmem:[#allocation5 + $0x2f8] sm:$0xff]
    %v294 = vld [vmem:[#allocation5 + $0x300] sm:$0xff]
    %v295 = vld [vmem:[#allocation5 + $0x308] sm:$0xff]
    %v296 = vld [vmem:[#allocation5 + $0x310] sm:$0xff]
    %v297 = vld [vmem:[#allocation5 + $0x318] sm:$0xff]
    %v298 = vld [vmem:[#allocation5 + $0x320] sm:$0xff]
    %v299 = vld [vmem:[#allocation5 + $0x328] sm:$0xff]
    %v300 = vld [vmem:[#allocation5 + $0x330] sm:$0xff]
    %v301 = vld [vmem:[#allocation5 + $0x338] sm:$0xff]
    %v302 = vld [vmem:[#allocation5 + $0x340] sm:$0xff]
    %v303 = vld [vmem:[#allocation5 + $0x348] sm:$0xff]
    %v304 = vld [vmem:[#allocation5 + $0x350] sm:$0xff]
    %v305 = vld [vmem:[#allocation5 + $0x358] sm:$0xff]
    %v306 = vld [vmem:[#allocation5 + $0x360] sm:$0xff]
    %v307 = vld [vmem:[#allocation5 + $0x368] sm:$0xff]
    %v308 = vld [vmem:[#allocation5 + $0x370] sm:$0xff]
    %v309 = vld [vmem:[#allocation5 + $0x378] sm:$0xff]
    %v310 = vld [vmem:[#allocation5 + $0x380] sm:$0xff]
    %v311 = vld [vmem:[#allocation5 + $0x388] sm:$0xff]
    %v312 = vld [vmem:[#allocation5 + $0x390] sm:$0xff]
    %v313 = vld [vmem:[#allocation5 + $0x398] sm:$0xff]
    %v314 = vld [vmem:[#allocation5 + $0x3a0] sm:$0xff]
    %v315 = vld [vmem:[#allocation5 + $0x3a8] sm:$0xff]
    %v316 = vld [vmem:[#allocation5 + $0x3b0] sm:$0xff]
    %v317 = vld [vmem:[#allocation5 + $0x3b8] sm:$0xff]
    %v318 = vld [vmem:[#allocation5 + $0x3c0] sm:$0xff]
    %v319 = vld [vmem:[#allocation5 + $0x3c8] sm:$0xff]
    %v320 = vld [vmem:[#allocation5 + $0x3d0] sm:$0xff]
    %v321 = vld [vmem:[#allocation5 + $0x3d8] sm:$0xff]
    %v322 = vld [vmem:[#allocation5 + $0x3e0] sm:$0xff]
    %v323 = vld [vmem:[#allocation5 + $0x3e8] sm:$0xff]
    %v324 = vld [vmem:[#allocation5 + $0x3f0] sm:$0xff]
    %v325 = vld [vmem:[#allocation5 + $0x3f8] sm:$0xff]
    %v326 = vld [vmem:[#allocation7] sm:$0x3]
    %v328 = vperm.slane %v326, 0
    %v329 = vperm.slane %v326, 1
    %v460 = vunpack.c.l.b16 %v198
    %v461 = vunpack.c.h.b16 %v198
    %v462 = vunpack.c.l.b16 %v199
    %v463 = vunpack.c.h.b16 %v199
    %v464 = vunpack.c.l.b16 %v200
    %v465 = vunpack.c.h.b16 %v200
    %v466 = vunpack.c.l.b16 %v201
    %v467 = vunpack.c.h.b16 %v201
    %v468 = vunpack.c.l.b16 %v202
    %v469 = vunpack.c.h.b16 %v202
    %v470 = vunpack.c.l.b16 %v203
    %v471 = vunpack.c.h.b16 %v203
    %v472 = vunpack.c.l.b16 %v204
    %v473 = vunpack.c.h.b16 %v204
    %v474 = vunpack.c.l.b16 %v205
    %v475 = vunpack.c.h.b16 %v205
    %v476 = vunpack.c.l.b16 %v206
    %v477 = vunpack.c.h.b16 %v206
    %v478 = vunpack.c.l.b16 %v207
    %v479 = vunpack.c.h.b16 %v207
    %v480 = vunpack.c.l.b16 %v208
    %v481 = vunpack.c.h.b16 %v208
    %v482 = vunpack.c.l.b16 %v209
    %v483 = vunpack.c.h.b16 %v209
    %v484 = vunpack.c.l.b16 %v210
    %v485 = vunpack.c.h.b16 %v210
    %v486 = vunpack.c.l.b16 %v211
    %v487 = vunpack.c.h.b16 %v211
    %v488 = vunpack.c.l.b16 %v212
    %v489 = vunpack.c.h.b16 %v212
    %v490 = vunpack.c.l.b16 %v213
    %v491 = vunpack.c.h.b16 %v213
    %v492 = vunpack.c.l.b16 %v214
    %v493 = vunpack.c.h.b16 %v214
    %v494 = vunpack.c.l.b16 %v215
    %v495 = vunpack.c.h.b16 %v215
    %v496 = vunpack.c.l.b16 %v216
    %v497 = vunpack.c.h.b16 %v216
    %v498 = vunpack.c.l.b16 %v217
    %v499 = vunpack.c.h.b16 %v217
    %v500 = vunpack.c.l.b16 %v218
    %v501 = vunpack.c.h.b16 %v218
    %v502 = vunpack.c.l.b16 %v219
    %v503 = vunpack.c.h.b16 %v219
    %v504 = vunpack.c.l.b16 %v220
    %v505 = vunpack.c.h.b16 %v220
    %v506 = vunpack.c.l.b16 %v221
    %v507 = vunpack.c.h.b16 %v221
    %v508 = vunpack.c.l.b16 %v222
    %v509 = vunpack.c.h.b16 %v222
    %v510 = vunpack.c.l.b16 %v223
    %v511 = vunpack.c.h.b16 %v223
    %v512 = vunpack.c.l.b16 %v224
    %v513 = vunpack.c.h.b16 %v224
    %v514 = vunpack.c.l.b16 %v225
    %v515 = vunpack.c.h.b16 %v225
    %v516 = vunpack.c.l.b16 %v226
    %v517 = vunpack.c.h.b16 %v226
    %v518 = vunpack.c.l.b16 %v227
    %v519 = vunpack.c.h.b16 %v227
    %v520 = vunpack.c.l.b16 %v228
    %v521 = vunpack.c.h.b16 %v228
    %v522 = vunpack.c.l.b16 %v229
    %v523 = vunpack.c.h.b16 %v229
    %v524 = vunpack.c.l.b16 %v230
    %v525 = vunpack.c.h.b16 %v230
    %v526 = vunpack.c.l.b16 %v231
    %v527 = vunpack.c.h.b16 %v231
    %v528 = vunpack.c.l.b16 %v232
    %v529 = vunpack.c.h.b16 %v232
    %v530 = vunpack.c.l.b16 %v233
    %v531 = vunpack.c.h.b16 %v233
    %v532 = vunpack.c.l.b16 %v234
    %v533 = vunpack.c.h.b16 %v234
    %v534 = vunpack.c.l.b16 %v235
    %v535 = vunpack.c.h.b16 %v235
    %v536 = vunpack.c.l.b16 %v236
    %v537 = vunpack.c.h.b16 %v236
    %v538 = vunpack.c.l.b16 %v237
    %v539 = vunpack.c.h.b16 %v237
    %v540 = vunpack.c.l.b16 %v238
    %v541 = vunpack.c.h.b16 %v238
    %v542 = vunpack.c.l.b16 %v239
    %v543 = vunpack.c.h.b16 %v239
    %v544 = vunpack.c.l.b16 %v240
    %v545 = vunpack.c.h.b16 %v240
    %v546 = vunpack.c.l.b16 %v241
    %v547 = vunpack.c.h.b16 %v241
    %v548 = vunpack.c.l.b16 %v242
    %v549 = vunpack.c.h.b16 %v242
    %v550 = vunpack.c.l.b16 %v243
    %v551 = vunpack.c.h.b16 %v243
    %v552 = vunpack.c.l.b16 %v244
    %v553 = vunpack.c.h.b16 %v244
    %v554 = vunpack.c.l.b16 %v245
    %v555 = vunpack.c.h.b16 %v245
    %v556 = vunpack.c.l.b16 %v246
    %v557 = vunpack.c.h.b16 %v246
    %v558 = vunpack.c.l.b16 %v247
    %v559 = vunpack.c.h.b16 %v247
    %v560 = vunpack.c.l.b16 %v248
    %v561 = vunpack.c.h.b16 %v248
    %v562 = vunpack.c.l.b16 %v249
    %v563 = vunpack.c.h.b16 %v249
    %v564 = vunpack.c.l.b16 %v250
    %v565 = vunpack.c.h.b16 %v250
    %v566 = vunpack.c.l.b16 %v251
    %v567 = vunpack.c.h.b16 %v251
    %v568 = vunpack.c.l.b16 %v252
    %v569 = vunpack.c.h.b16 %v252
    %v570 = vunpack.c.l.b16 %v253
    %v571 = vunpack.c.h.b16 %v253
    %v572 = vunpack.c.l.b16 %v254
    %v573 = vunpack.c.h.b16 %v254
    %v574 = vunpack.c.l.b16 %v255
    %v575 = vunpack.c.h.b16 %v255
    %v576 = vunpack.c.l.b16 %v256
    %v577 = vunpack.c.h.b16 %v256
    %v578 = vunpack.c.l.b16 %v257
    %v579 = vunpack.c.h.b16 %v257
    %v580 = vunpack.c.l.b16 %v258
    %v581 = vunpack.c.h.b16 %v258
    %v582 = vunpack.c.l.b16 %v259
    %v583 = vunpack.c.h.b16 %v259
    %v584 = vunpack.c.l.b16 %v260
    %v585 = vunpack.c.h.b16 %v260
    %v586 = vunpack.c.l.b16 %v261
    %v587 = vunpack.c.h.b16 %v261
    %v588 = vunpack.c.l.b16 %v262
    %v589 = vunpack.c.h.b16 %v262
    %v590 = vunpack.c.l.b16 %v263
    %v591 = vunpack.c.h.b16 %v263
    %v592 = vunpack.c.l.b16 %v264
    %v593 = vunpack.c.h.b16 %v264
    %v594 = vunpack.c.l.b16 %v265
    %v595 = vunpack.c.h.b16 %v265
    %v596 = vunpack.c.l.b16 %v266
    %v597 = vunpack.c.h.b16 %v266
    %v598 = vunpack.c.l.b16 %v267
    %v599 = vunpack.c.h.b16 %v267
    %v600 = vunpack.c.l.b16 %v268
    %v601 = vunpack.c.h.b16 %v268
    %v602 = vunpack.c.l.b16 %v269
    %v603 = vunpack.c.h.b16 %v269
    %v604 = vunpack.c.l.b16 %v270
    %v605 = vunpack.c.h.b16 %v270
    %v606 = vunpack.c.l.b16 %v271
    %v607 = vunpack.c.h.b16 %v271
    %v608 = vunpack.c.l.b16 %v272
    %v609 = vunpack.c.h.b16 %v272
    %v610 = vunpack.c.l.b16 %v273
    %v611 = vunpack.c.h.b16 %v273
    %v612 = vunpack.c.l.b16 %v274
    %v613 = vunpack.c.h.b16 %v274
    %v614 = vunpack.c.l.b16 %v275
    %v615 = vunpack.c.h.b16 %v275
    %v616 = vunpack.c.l.b16 %v276
    %v617 = vunpack.c.h.b16 %v276
    %v618 = vunpack.c.l.b16 %v277
    %v619 = vunpack.c.h.b16 %v277
    %v620 = vunpack.c.l.b16 %v278
    %v621 = vunpack.c.h.b16 %v278
    %v622 = vunpack.c.l.b16 %v279
    %v623 = vunpack.c.h.b16 %v279
    %v624 = vunpack.c.l.b16 %v280
    %v625 = vunpack.c.h.b16 %v280
    %v626 = vunpack.c.l.b16 %v281
    %v627 = vunpack.c.h.b16 %v281
    %v628 = vunpack.c.l.b16 %v282
    %v629 = vunpack.c.h.b16 %v282
    %v630 = vunpack.c.l.b16 %v283
    %v631 = vunpack.c.h.b16 %v283
    %v632 = vunpack.c.l.b16 %v284
    %v633 = vunpack.c.h.b16 %v284
    %v634 = vunpack.c.l.b16 %v285
    %v635 = vunpack.c.h.b16 %v285
    %v636 = vunpack.c.l.b16 %v286
    %v637 = vunpack.c.h.b16 %v286
    %v638 = vunpack.c.l.b16 %v287
    %v639 = vunpack.c.h.b16 %v287
    %v640 = vunpack.c.l.b16 %v288
    %v641 = vunpack.c.h.b16 %v288
    %v642 = vunpack.c.l.b16 %v289
    %v643 = vunpack.c.h.b16 %v289
    %v644 = vunpack.c.l.b16 %v290
    %v645 = vunpack.c.h.b16 %v290
    %v646 = vunpack.c.l.b16 %v291
    %v647 = vunpack.c.h.b16 %v291
    %v648 = vunpack.c.l.b16 %v292
    %v649 = vunpack.c.h.b16 %v292
    %v650 = vunpack.c.l.b16 %v293
    %v651 = vunpack.c.h.b16 %v293
    %v652 = vunpack.c.l.b16 %v294
    %v653 = vunpack.c.h.b16 %v294
    %v654 = vunpack.c.l.b16 %v295
    %v655 = vunpack.c.h.b16 %v295
    %v656 = vunpack.c.l.b16 %v296
    %v657 = vunpack.c.h.b16 %v296
    %v658 = vunpack.c.l.b16 %v297
    %v659 = vunpack.c.h.b16 %v297
    %v660 = vunpack.c.l.b16 %v298
    %v661 = vunpack.c.h.b16 %v298
    %v662 = vunpack.c.l.b16 %v299
    %v663 = vunpack.c.h.b16 %v299
    %v664 = vunpack.c.l.b16 %v300
    %v665 = vunpack.c.h.b16 %v300
    %v666 = vunpack.c.l.b16 %v301
    %v667 = vunpack.c.h.b16 %v301
    %v668 = vunpack.c.l.b16 %v302
    %v669 = vunpack.c.h.b16 %v302
    %v670 = vunpack.c.l.b16 %v303
    %v671 = vunpack.c.h.b16 %v303
    %v672 = vunpack.c.l.b16 %v304
    %v673 = vunpack.c.h.b16 %v304
    %v674 = vunpack.c.l.b16 %v305
    %v675 = vunpack.c.h.b16 %v305
    %v676 = vunpack.c.l.b16 %v306
    %v677 = vunpack.c.h.b16 %v306
    %v678 = vunpack.c.l.b16 %v307
    %v679 = vunpack.c.h.b16 %v307
    %v680 = vunpack.c.l.b16 %v308
    %v681 = vunpack.c.h.b16 %v308
    %v682 = vunpack.c.l.b16 %v309
    %v683 = vunpack.c.h.b16 %v309
    %v684 = vunpack.c.l.b16 %v310
    %v685 = vunpack.c.h.b16 %v310
    %v686 = vunpack.c.l.b16 %v311
    %v687 = vunpack.c.h.b16 %v311
    %v688 = vunpack.c.l.b16 %v312
    %v689 = vunpack.c.h.b16 %v312
    %v690 = vunpack.c.l.b16 %v313
    %v691 = vunpack.c.h.b16 %v313
    %v692 = vunpack.c.l.b16 %v314
    %v693 = vunpack.c.h.b16 %v314
    %v694 = vunpack.c.l.b16 %v315
    %v695 = vunpack.c.h.b16 %v315
    %v696 = vunpack.c.l.b16 %v316
    %v697 = vunpack.c.h.b16 %v316
    %v698 = vunpack.c.l.b16 %v317
    %v699 = vunpack.c.h.b16 %v317
    %v700 = vunpack.c.l.b16 %v318
    %v701 = vunpack.c.h.b16 %v318
    %v702 = vunpack.c.l.b16 %v319
    %v703 = vunpack.c.h.b16 %v319
    %v704 = vunpack.c.l.b16 %v320
    %v705 = vunpack.c.h.b16 %v320
    %v706 = vunpack.c.l.b16 %v321
    %v707 = vunpack.c.h.b16 %v321
    %v708 = vunpack.c.l.b16 %v322
    %v709 = vunpack.c.h.b16 %v322
    %v710 = vunpack.c.l.b16 %v323
    %v711 = vunpack.c.h.b16 %v323
    %v712 = vunpack.c.l.b16 %v324
    %v713 = vunpack.c.h.b16 %v324
    %v714 = vunpack.c.l.b16 %v325
    %v715 = vunpack.c.h.b16 %v325
    %v716 = vpack.c.b16 %v462, %v460
    %v717 = vpack.c.b16 %v463, %v461
    %v718 = vpack.c.b16 %v466, %v464
    %v719 = vpack.c.b16 %v467, %v465
    %v720 = vpack.c.b16 %v470, %v468
    %v721 = vpack.c.b16 %v471, %v469
    %v722 = vpack.c.b16 %v474, %v472
    %v723 = vpack.c.b16 %v475, %v473
    %v724 = vpack.c.b16 %v478, %v476
    %v725 = vpack.c.b16 %v479, %v477
    %v726 = vpack.c.b16 %v482, %v480
    %v727 = vpack.c.b16 %v483, %v481
    %v728 = vpack.c.b16 %v486, %v484
    %v729 = vpack.c.b16 %v487, %v485
    %v730 = vpack.c.b16 %v490, %v488
    %v731 = vpack.c.b16 %v491, %v489
    %v732 = vpack.c.b16 %v494, %v492
    %v733 = vpack.c.b16 %v495, %v493
    %v734 = vpack.c.b16 %v498, %v496
    %v735 = vpack.c.b16 %v499, %v497
    %v736 = vpack.c.b16 %v502, %v500
    %v737 = vpack.c.b16 %v503, %v501
    %v738 = vpack.c.b16 %v506, %v504
    %v739 = vpack.c.b16 %v507, %v505
    %v740 = vpack.c.b16 %v510, %v508
    %v741 = vpack.c.b16 %v511, %v509
    %v742 = vpack.c.b16 %v514, %v512
    %v743 = vpack.c.b16 %v515, %v513
    %v744 = vpack.c.b16 %v518, %v516
    %v745 = vpack.c.b16 %v519, %v517
    %v746 = vpack.c.b16 %v522, %v520
    %v747 = vpack.c.b16 %v523, %v521
    %v748 = vpack.c.b16 %v526, %v524
    %v749 = vpack.c.b16 %v527, %v525
    %v750 = vpack.c.b16 %v530, %v528
    %v751 = vpack.c.b16 %v531, %v529
    %v752 = vpack.c.b16 %v534, %v532
    %v753 = vpack.c.b16 %v535, %v533
    %v754 = vpack.c.b16 %v538, %v536
    %v755 = vpack.c.b16 %v539, %v537
    %v756 = vpack.c.b16 %v542, %v540
    %v757 = vpack.c.b16 %v543, %v541
    %v758 = vpack.c.b16 %v546, %v544
    %v759 = vpack.c.b16 %v547, %v545
    %v760 = vpack.c.b16 %v550, %v548
    %v761 = vpack.c.b16 %v551, %v549
    %v762 = vpack.c.b16 %v554, %v552
    %v763 = vpack.c.b16 %v555, %v553
    %v764 = vpack.c.b16 %v558, %v556
    %v765 = vpack.c.b16 %v559, %v557
    %v766 = vpack.c.b16 %v562, %v560
    %v767 = vpack.c.b16 %v563, %v561
    %v768 = vpack.c.b16 %v566, %v564
    %v769 = vpack.c.b16 %v567, %v565
    %v770 = vpack.c.b16 %v570, %v568
    %v771 = vpack.c.b16 %v571, %v569
    %v772 = vpack.c.b16 %v574, %v572
    %v773 = vpack.c.b16 %v575, %v573
    %v774 = vpack.c.b16 %v578, %v576
    %v775 = vpack.c.b16 %v579, %v577
    %v776 = vpack.c.b16 %v582, %v580
    %v777 = vpack.c.b16 %v583, %v581
    %v778 = vpack.c.b16 %v586, %v584
    %v779 = vpack.c.b16 %v587, %v585
    %v780 = vpack.c.b16 %v590, %v588
    %v781 = vpack.c.b16 %v591, %v589
    %v782 = vpack.c.b16 %v594, %v592
    %v783 = vpack.c.b16 %v595, %v593
    %v784 = vpack.c.b16 %v598, %v596
    %v785 = vpack.c.b16 %v599, %v597
    %v786 = vpack.c.b16 %v602, %v600
    %v787 = vpack.c.b16 %v603, %v601
    %v788 = vpack.c.b16 %v606, %v604
    %v789 = vpack.c.b16 %v607, %v605
    %v790 = vpack.c.b16 %v610, %v608
    %v791 = vpack.c.b16 %v611, %v609
    %v792 = vpack.c.b16 %v614, %v612
    %v793 = vpack.c.b16 %v615, %v613
    %v794 = vpack.c.b16 %v618, %v616
    %v795 = vpack.c.b16 %v619, %v617
    %v796 = vpack.c.b16 %v622, %v620
    %v797 = vpack.c.b16 %v623, %v621
    %v798 = vpack.c.b16 %v626, %v624
    %v799 = vpack.c.b16 %v627, %v625
    %v800 = vpack.c.b16 %v630, %v628
    %v801 = vpack.c.b16 %v631, %v629
    %v802 = vpack.c.b16 %v634, %v632
    %v803 = vpack.c.b16 %v635, %v633
    %v804 = vpack.c.b16 %v638, %v636
    %v805 = vpack.c.b16 %v639, %v637
    %v806 = vpack.c.b16 %v642, %v640
    %v807 = vpack.c.b16 %v643, %v641
    %v808 = vpack.c.b16 %v646, %v644
    %v809 = vpack.c.b16 %v647, %v645
    %v810 = vpack.c.b16 %v650, %v648
    %v811 = vpack.c.b16 %v651, %v649
    %v812 = vpack.c.b16 %v654, %v652
    %v813 = vpack.c.b16 %v655, %v653
    %v814 = vpack.c.b16 %v658, %v656
    %v815 = vpack.c.b16 %v659, %v657
    %v816 = vpack.c.b16 %v662, %v660
    %v817 = vpack.c.b16 %v663, %v661
    %v818 = vpack.c.b16 %v666, %v664
    %v819 = vpack.c.b16 %v667, %v665
    %v820 = vpack.c.b16 %v670, %v668
    %v821 = vpack.c.b16 %v671, %v669
    %v822 = vpack.c.b16 %v674, %v672
    %v823 = vpack.c.b16 %v675, %v673
    %v824 = vpack.c.b16 %v678, %v676
    %v825 = vpack.c.b16 %v679, %v677
    %v826 = vpack.c.b16 %v682, %v680
    %v827 = vpack.c.b16 %v683, %v681
    %v828 = vpack.c.b16 %v686, %v684
    %v829 = vpack.c.b16 %v687, %v685
    %v830 = vpack.c.b16 %v690, %v688
    %v831 = vpack.c.b16 %v691, %v689
    %v832 = vpack.c.b16 %v694, %v692
    %v833 = vpack.c.b16 %v695, %v693
    %v834 = vpack.c.b16 %v698, %v696
    %v835 = vpack.c.b16 %v699, %v697
    %v836 = vpack.c.b16 %v702, %v700
    %v837 = vpack.c.b16 %v703, %v701
    %v838 = vpack.c.b16 %v706, %v704
    %v839 = vpack.c.b16 %v707, %v705
    %v840 = vpack.c.b16 %v710, %v708
    %v841 = vpack.c.b16 %v711, %v709
    %v842 = vpack.c.b16 %v714, %v712
    %v843 = vpack.c.b16 %v715, %v713
    %972 = vmatpush.bf16.msra.mxu0 %v730
    %973 = vmatpush.bf16.msra.mxu0 %v728
    %974 = vmatpush.bf16.msra.mxu0 %v726
    %975 = vmatpush.bf16.msra.mxu0 %v724
    %976 = vmatpush.bf16.msra.mxu0 %v722
    %977 = vmatpush.bf16.msra.mxu0 %v720
    %978 = vmatpush.bf16.msra.mxu0 %v718
    %979 = vmatpush.bf16.msra.mxu0 %v716
    %980 = vmatmul.bf16.gmra.mxu0 %v190
    %v981 = vpop.f32.mrf.mxu0
    %v982 = vadd.f32 %v328, %v981
    %v983 = vpop.f32.mrf.mxu0
    %v984 = vadd.f32 %v328, %v983
    %985 = vdwg.mxu0
    %986 = vmatpush.bf16.msra.mxu0 %v746
    %987 = vmatpush.bf16.msra.mxu0 %v744
    %988 = vmatpush.bf16.msra.mxu0 %v742
    %989 = vmatpush.bf16.msra.mxu0 %v740
    %990 = vmatpush.bf16.msra.mxu0 %v738
    %991 = vmatpush.bf16.msra.mxu0 %v736
    %992 = vmatpush.bf16.msra.mxu0 %v734
    %993 = vmatpush.bf16.msra.mxu0 %v732
    %994 = vmatmul.bf16.gmra.mxu0 %v191
    %v995 = vpop.f32.mrf.mxu0
    %v996 = vadd.f32 %v982, %v995
    %v997 = vpop.f32.mrf.mxu0
    %v998 = vadd.f32 %v984, %v997
    %999 = vdwg.mxu0
    %1000 = vmatpush.bf16.msra.mxu0 %v762
    %1001 = vmatpush.bf16.msra.mxu0 %v760
    %1002 = vmatpush.bf16.msra.mxu0 %v758
    %1003 = vmatpush.bf16.msra.mxu0 %v756
    %1004 = vmatpush.bf16.msra.mxu0 %v754
    %1005 = vmatpush.bf16.msra.mxu0 %v752
    %1006 = vmatpush.bf16.msra.mxu0 %v750
    %1007 = vmatpush.bf16.msra.mxu0 %v748
    %1008 = vmatmul.bf16.gmra.mxu0 %v192
    %v1009 = vpop.f32.mrf.mxu0
    %v1010 = vadd.f32 %v996, %v1009
    %v1011 = vpop.f32.mrf.mxu0
    %v1012 = vadd.f32 %v998, %v1011
    %1013 = vdwg.mxu0
    %1014 = vmatpush.bf16.msra.mxu0 %v778
    %1015 = vmatpush.bf16.msra.mxu0 %v776
    %1016 = vmatpush.bf16.msra.mxu0 %v774
    %1017 = vmatpush.bf16.msra.mxu0 %v772
    %1018 = vmatpush.bf16.msra.mxu0 %v770
    %1019 = vmatpush.bf16.msra.mxu0 %v768
    %1020 = vmatpush.bf16.msra.mxu0 %v766
    %1021 = vmatpush.bf16.msra.mxu0 %v764
    %1022 = vmatmul.bf16.gmra.mxu0 %v193
    %v1023 = vpop.f32.mrf.mxu0
    %v1024 = vadd.f32 %v1010, %v1023
    %v1025 = vpop.f32.mrf.mxu0
    %v1026 = vadd.f32 %v1012, %v1025
    %1027 = vdwg.mxu0
    %1028 = vmatpush.bf16.msra.mxu0 %v794
    %1029 = vmatpush.bf16.msra.mxu0 %v792
    %1030 = vmatpush.bf16.msra.mxu0 %v790
    %1031 = vmatpush.bf16.msra.mxu0 %v788
    %1032 = vmatpush.bf16.msra.mxu0 %v786
    %1033 = vmatpush.bf16.msra.mxu0 %v784
    %1034 = vmatpush.bf16.msra.mxu0 %v782
    %1035 = vmatpush.bf16.msra.mxu0 %v780
    %1036 = vmatmul.bf16.gmra.mxu0 %v194
    %v1037 = vpop.f32.mrf.mxu0
    %v1038 = vadd.f32 %v1024, %v1037
    %v1039 = vpop.f32.mrf.mxu0
    %v1040 = vadd.f32 %v1026, %v1039
    %1041 = vdwg.mxu0
    %1042 = vmatpush.bf16.msra.mxu0 %v810
    %1043 = vmatpush.bf16.msra.mxu0 %v808
    %1044 = vmatpush.bf16.msra.mxu0 %v806
    %1045 = vmatpush.bf16.msra.mxu0 %v804
    %1046 = vmatpush.bf16.msra.mxu0 %v802
    %1047 = vmatpush.bf16.msra.mxu0 %v800
    %1048 = vmatpush.bf16.msra.mxu0 %v798
    %1049 = vmatpush.bf16.msra.mxu0 %v796
    %1050 = vmatmul.bf16.gmra.mxu0 %v195
    %v1051 = vpop.f32.mrf.mxu0
    %v1052 = vadd.f32 %v1038, %v1051
    %v1053 = vpop.f32.mrf.mxu0
    %v1054 = vadd.f32 %v1040, %v1053
    %1055 = vdwg.mxu0
    %1056 = vmatpush.bf16.msra.mxu0 %v826
    %1057 = vmatpush.bf16.msra.mxu0 %v824
    %1058 = vmatpush.bf16.msra.mxu0 %v822
    %1059 = vmatpush.bf16.msra.mxu0 %v820
    %1060 = vmatpush.bf16.msra.mxu0 %v818
    %1061 = vmatpush.bf16.msra.mxu0 %v816
    %1062 = vmatpush.bf16.msra.mxu0 %v814
    %1063 = vmatpush.bf16.msra.mxu0 %v812
    %1064 = vmatmul.bf16.gmra.mxu0 %v196
    %v1065 = vpop.f32.mrf.mxu0
    %v1066 = vadd.f32 %v1052, %v1065
    %v1067 = vpop.f32.mrf.mxu0
    %v1068 = vadd.f32 %v1054, %v1067
    %1069 = vdwg.mxu0
    %1070 = vmatpush.bf16.msra.mxu0 %v842
    %1071 = vmatpush.bf16.msra.mxu0 %v840
    %1072 = vmatpush.bf16.msra.mxu0 %v838
    %1073 = vmatpush.bf16.msra.mxu0 %v836
    %1074 = vmatpush.bf16.msra.mxu0 %v834
    %1075 = vmatpush.bf16.msra.mxu0 %v832
    %1076 = vmatpush.bf16.msra.mxu0 %v830
    %1077 = vmatpush.bf16.msra.mxu0 %v828
    %1078 = vmatmul.bf16.gmra.mxu0 %v197
    %v1079 = vpop.f32.mrf.mxu0
    %v1080 = vadd.f32 %v1066, %v1079
    %v1081 = vpop.f32.mrf.mxu0
    %v1082 = vadd.f32 %v1068, %v1081
    %1083 = vdwg.mxu0
    %1084 = vmatpush.bf16.msra.mxu0 %v731
    %1085 = vmatpush.bf16.msra.mxu0 %v729
    %1086 = vmatpush.bf16.msra.mxu0 %v727
    %1087 = vmatpush.bf16.msra.mxu0 %v725
    %1088 = vmatpush.bf16.msra.mxu0 %v723
    %1089 = vmatpush.bf16.msra.mxu0 %v721
    %1090 = vmatpush.bf16.msra.mxu0 %v719
    %1091 = vmatpush.bf16.msra.mxu0 %v717
    %1092 = vmatmul.bf16.gmra.mxu0 %v190
    %v1093 = vpop.f32.mrf.mxu0
    %v1094 = vadd.f32 %v329, %v1093
    %v1095 = vpop.f32.mrf.mxu0
    %v1096 = vadd.f32 %v329, %v1095
    %1097 = vdwg.mxu0
    %1098 = vmatpush.bf16.msra.mxu0 %v747
    %1099 = vmatpush.bf16.msra.mxu0 %v745
    %1100 = vmatpush.bf16.msra.mxu0 %v743
    %1101 = vmatpush.bf16.msra.mxu0 %v741
    %1102 = vmatpush.bf16.msra.mxu0 %v739
    %1103 = vmatpush.bf16.msra.mxu0 %v737
    %1104 = vmatpush.bf16.msra.mxu0 %v735
    %1105 = vmatpush.bf16.msra.mxu0 %v733
    %1106 = vmatmul.bf16.gmra.mxu0 %v191
    %v1107 = vpop.f32.mrf.mxu0
    %v1108 = vadd.f32 %v1094, %v1107
    %v1109 = vpop.f32.mrf.mxu0
    %v1110 = vadd.f32 %v1096, %v1109
    %1111 = vdwg.mxu0
    %1112 = vmatpush.bf16.msra.mxu0 %v763
    %1113 = vmatpush.bf16.msra.mxu0 %v761
    %1114 = vmatpush.bf16.msra.mxu0 %v759
    %1115 = vmatpush.bf16.msra.mxu0 %v757
    %1116 = vmatpush.bf16.msra.mxu0 %v755
    %1117 = vmatpush.bf16.msra.mxu0 %v753
    %1118 = vmatpush.bf16.msra.mxu0 %v751
    %1119 = vmatpush.bf16.msra.mxu0 %v749
    %1120 = vmatmul.bf16.gmra.mxu0 %v192
    %v1121 = vpop.f32.mrf.mxu0
    %v1122 = vadd.f32 %v1108, %v1121
    %v1123 = vpop.f32.mrf.mxu0
    %v1124 = vadd.f32 %v1110, %v1123
    %1125 = vdwg.mxu0
    %1126 = vmatpush.bf16.msra.mxu0 %v779
    %1127 = vmatpush.bf16.msra.mxu0 %v777
    %1128 = vmatpush.bf16.msra.mxu0 %v775
    %1129 = vmatpush.bf16.msra.mxu0 %v773
    %1130 = vmatpush.bf16.msra.mxu0 %v771
    %1131 = vmatpush.bf16.msra.mxu0 %v769
    %1132 = vmatpush.bf16.msra.mxu0 %v767
    %1133 = vmatpush.bf16.msra.mxu0 %v765
    %1134 = vmatmul.bf16.gmra.mxu0 %v193
    %v1135 = vpop.f32.mrf.mxu0
    %v1136 = vadd.f32 %v1122, %v1135
    %v1137 = vpop.f32.mrf.mxu0
    %v1138 = vadd.f32 %v1124, %v1137
    %1139 = vdwg.mxu0
    %1140 = vmatpush.bf16.msra.mxu0 %v795
    %1141 = vmatpush.bf16.msra.mxu0 %v793
    %1142 = vmatpush.bf16.msra.mxu0 %v791
    %1143 = vmatpush.bf16.msra.mxu0 %v789
    %1144 = vmatpush.bf16.msra.mxu0 %v787
    %1145 = vmatpush.bf16.msra.mxu0 %v785
    %1146 = vmatpush.bf16.msra.mxu0 %v783
    %1147 = vmatpush.bf16.msra.mxu0 %v781
    %1148 = vmatmul.bf16.gmra.mxu0 %v194
    %v1149 = vpop.f32.mrf.mxu0
    %v1150 = vadd.f32 %v1136, %v1149
    %v1151 = vpop.f32.mrf.mxu0
    %v1152 = vadd.f32 %v1138, %v1151
    %1153 = vdwg.mxu0
    %1154 = vmatpush.bf16.msra.mxu0 %v811
    %1155 = vmatpush.bf16.msra.mxu0 %v809
    %1156 = vmatpush.bf16.msra.mxu0 %v807
    %1157 = vmatpush.bf16.msra.mxu0 %v805
    %1158 = vmatpush.bf16.msra.mxu0 %v803
    %1159 = vmatpush.bf16.msra.mxu0 %v801
    %1160 = vmatpush.bf16.msra.mxu0 %v799
    %1161 = vmatpush.bf16.msra.mxu0 %v797
    %1162 = vmatmul.bf16.gmra.mxu0 %v195
    %v1163 = vpop.f32.mrf.mxu0
    %v1164 = vadd.f32 %v1150, %v1163
    %v1165 = vpop.f32.mrf.mxu0
    %v1166 = vadd.f32 %v1152, %v1165
    %1167 = vdwg.mxu0
    %1168 = vmatpush.bf16.msra.mxu0 %v827
    %1169 = vmatpush.bf16.msra.mxu0 %v825
    %1170 = vmatpush.bf16.msra.mxu0 %v823
    %1171 = vmatpush.bf16.msra.mxu0 %v821
    %1172 = vmatpush.bf16.msra.mxu0 %v819
    %1173 = vmatpush.bf16.msra.mxu0 %v817
    %1174 = vmatpush.bf16.msra.mxu0 %v815
    %1175 = vmatpush.bf16.msra.mxu0 %v813
    %1176 = vmatmul.bf16.gmra.mxu0 %v196
    %v1177 = vpop.f32.mrf.mxu0
    %v1178 = vadd.f32 %v1164, %v1177
    %v1179 = vpop.f32.mrf.mxu0
    %v1180 = vadd.f32 %v1166, %v1179
    %1181 = vdwg.mxu0
    %1182 = vmatpush.bf16.msra.mxu0 %v843
    %1183 = vmatpush.bf16.msra.mxu0 %v841
    %1184 = vmatpush.bf16.msra.mxu0 %v839
    %1185 = vmatpush.bf16.msra.mxu0 %v837
    %1186 = vmatpush.bf16.msra.mxu0 %v835
    %1187 = vmatpush.bf16.msra.mxu0 %v833
    %1188 = vmatpush.bf16.msra.mxu0 %v831
    %1189 = vmatpush.bf16.msra.mxu0 %v829
    %1190 = vmatmul.bf16.gmra.mxu0 %v197
    %v1191 = vpop.f32.mrf.mxu0
    %v1192 = vadd.f32 %v1178, %v1191
    %v1193 = vpop.f32.mrf.mxu0
    %v1194 = vadd.f32 %v1180, %v1193
    %1195 = vdwg.mxu0
    %v1196 = vmax.f32 %v1080, 0.0
    %v1197 = vmax.f32 %v1192, 0.0
    %v1198 = vmax.f32 %v1082, 0.0
    %v1199 = vmax.f32 %v1194, 0.0
    %v1200 = vpack.c.bf16 %v1198, %v1196
    %v1201 = vpack.c.bf16 %v1199, %v1197
    %v1202 = vld [vmem:[#allocation8] sm:$0xff]
    %v1203 = vld [vmem:[#allocation8 + $0x8] sm:$0xff]
    %v1204 = vld [vmem:[#allocation8 + $0x10] sm:$0xff]
    %v1205 = vld [vmem:[#allocation8 + $0x18] sm:$0xff]
    %v1206 = vld [vmem:[#allocation8 + $0x20] sm:$0xff]
    %v1207 = vld [vmem:[#allocation8 + $0x28] sm:$0xff]
    %v1208 = vld [vmem:[#allocation8 + $0x30] sm:$0xff]
    %v1209 = vld [vmem:[#allocation8 + $0x38] sm:$0xff]
    %v1210 = vld [vmem:[#allocation8 + $0x40] sm:$0xff]
    %v1211 = vld [vmem:[#allocation8 + $0x48] sm:$0xff]
    %v1212 = vld [vmem:[#allocation8 + $0x50] sm:$0xff]
    %v1213 = vld [vmem:[#allocation8 + $0x58] sm:$0xff]
    %v1214 = vld [vmem:[#allocation8 + $0x60] sm:$0xff]
    %v1215 = vld [vmem:[#allocation8 + $0x68] sm:$0xff]
    %v1216 = vld [vmem:[#allocation8 + $0x70] sm:$0xff]
    %v1217 = vld [vmem:[#allocation8 + $0x78] sm:$0xff]
    %v1218 = vld [vmem:[#allocation8 + $0x80] sm:$0xff]
    %v1219 = vld [vmem:[#allocation8 + $0x88] sm:$0xff]
    %v1220 = vld [vmem:[#allocation8 + $0x90] sm:$0xff]
    %v1221 = vld [vmem:[#allocation8 + $0x98] sm:$0xff]
    %v1222 = vld [vmem:[#allocation8 + $0xa0] sm:$0xff]
    %v1223 = vld [vmem:[#allocation8 + $0xa8] sm:$0xff]
    %v1224 = vld [vmem:[#allocation8 + $0xb0] sm:$0xff]
    %v1225 = vld [vmem:[#allocation8 + $0xb8] sm:$0xff]
    %v1226 = vld [vmem:[#allocation8 + $0xc0] sm:$0xff]
    %v1227 = vld [vmem:[#allocation8 + $0xc8] sm:$0xff]
    %v1228 = vld [vmem:[#allocation8 + $0xd0] sm:$0xff]
    %v1229 = vld [vmem:[#allocation8 + $0xd8] sm:$0xff]
    %v1230 = vld [vmem:[#allocation8 + $0xe0] sm:$0xff]
    %v1231 = vld [vmem:[#allocation8 + $0xe8] sm:$0xff]
    %v1232 = vld [vmem:[#allocation8 + $0xf0] sm:$0xff]
    %v1233 = vld [vmem:[#allocation8 + $0xf8] sm:$0xff]
    %v1234 = vld [vmem:[%s4] sm:$0x3]
    %v1236 = vperm.slane %v1234, 0
    %v1237 = vperm.slane %v1234, 1
    %v1272 = vunpack.c.l.b16 %v1202
    %v1273 = vunpack.c.h.b16 %v1202
    %v1274 = vunpack.c.l.b16 %v1203
    %v1275 = vunpack.c.h.b16 %v1203
    %v1276 = vunpack.c.l.b16 %v1204
    %v1277 = vunpack.c.h.b16 %v1204
    %v1278 = vunpack.c.l.b16 %v1205
    %v1279 = vunpack.c.h.b16 %v1205
    %v1280 = vunpack.c.l.b16 %v1206
    %v1281 = vunpack.c.h.b16 %v1206
    %v1282 = vunpack.c.l.b16 %v1207
    %v1283 = vunpack.c.h.b16 %v1207
    %v1284 = vunpack.c.l.b16 %v1208
    %v1285 = vunpack.c.h.b16 %v1208
    %v1286 = vunpack.c.l.b16 %v1209
    %v1287 = vunpack.c.h.b16 %v1209
    %v1288 = vunpack.c.l.b16 %v1210
    %v1289 = vunpack.c.h.b16 %v1210
    %v1290 = vunpack.c.l.b16 %v1211
    %v1291 = vunpack.c.h.b16 %v1211
    %v1292 = vunpack.c.l.b16 %v1212
    %v1293 = vunpack.c.h.b16 %v1212
    %v1294 = vunpack.c.l.b16 %v1213
    %v1295 = vunpack.c.h.b16 %v1213
    %v1296 = vunpack.c.l.b16 %v1214
    %v1297 = vunpack.c.h.b16 %v1214
    %v1298 = vunpack.c.l.b16 %v1215
    %v1299 = vunpack.c.h.b16 %v1215
    %v1300 = vunpack.c.l.b16 %v1216
    %v1301 = vunpack.c.h.b16 %v1216
    %v1302 = vunpack.c.l.b16 %v1217
    %v1303 = vunpack.c.h.b16 %v1217
    %v1304 = vunpack.c.l.b16 %v1218
    %v1305 = vunpack.c.h.b16 %v1218
    %v1306 = vunpack.c.l.b16 %v1219
    %v1307 = vunpack.c.h.b16 %v1219
    %v1308 = vunpack.c.l.b16 %v1220
    %v1309 = vunpack.c.h.b16 %v1220
    %v1310 = vunpack.c.l.b16 %v1221
    %v1311 = vunpack.c.h.b16 %v1221
    %v1312 = vunpack.c.l.b16 %v1222
    %v1313 = vunpack.c.h.b16 %v1222
    %v1314 = vunpack.c.l.b16 %v1223
    %v1315 = vunpack.c.h.b16 %v1223
    %v1316 = vunpack.c.l.b16 %v1224
    %v1317 = vunpack.c.h.b16 %v1224
    %v1318 = vunpack.c.l.b16 %v1225
    %v1319 = vunpack.c.h.b16 %v1225
    %v1320 = vunpack.c.l.b16 %v1226
    %v1321 = vunpack.c.h.b16 %v1226
    %v1322 = vunpack.c.l.b16 %v1227
    %v1323 = vunpack.c.h.b16 %v1227
    %v1324 = vunpack.c.l.b16 %v1228
    %v1325 = vunpack.c.h.b16 %v1228
    %v1326 = vunpack.c.l.b16 %v1229
    %v1327 = vunpack.c.h.b16 %v1229
    %v1328 = vunpack.c.l.b16 %v1230
    %v1329 = vunpack.c.h.b16 %v1230
    %v1330 = vunpack.c.l.b16 %v1231
    %v1331 = vunpack.c.h.b16 %v1231
    %v1332 = vunpack.c.l.b16 %v1232
    %v1333 = vunpack.c.h.b16 %v1232
    %v1334 = vunpack.c.l.b16 %v1233
    %v1335 = vunpack.c.h.b16 %v1233
    %v1336 = vpack.c.b16 %v1274, %v1272
    %v1337 = vpack.c.b16 %v1275, %v1273
    %v1338 = vpack.c.b16 %v1278, %v1276
    %v1339 = vpack.c.b16 %v1279, %v1277
    %v1340 = vpack.c.b16 %v1282, %v1280
    %v1341 = vpack.c.b16 %v1283, %v1281
    %v1342 = vpack.c.b16 %v1286, %v1284
    %v1343 = vpack.c.b16 %v1287, %v1285
    %v1344 = vpack.c.b16 %v1290, %v1288
    %v1345 = vpack.c.b16 %v1291, %v1289
    %v1346 = vpack.c.b16 %v1294, %v1292
    %v1347 = vpack.c.b16 %v1295, %v1293
    %v1348 = vpack.c.b16 %v1298, %v1296
    %v1349 = vpack.c.b16 %v1299, %v1297
    %v1350 = vpack.c.b16 %v1302, %v1300
    %v1351 = vpack.c.b16 %v1303, %v1301
    %v1352 = vpack.c.b16 %v1306, %v1304
    %v1353 = vpack.c.b16 %v1307, %v1305
    %v1354 = vpack.c.b16 %v1310, %v1308
    %v1355 = vpack.c.b16 %v1311, %v1309
    %v1356 = vpack.c.b16 %v1314, %v1312
    %v1357 = vpack.c.b16 %v1315, %v1313
    %v1358 = vpack.c.b16 %v1318, %v1316
    %v1359 = vpack.c.b16 %v1319, %v1317
    %v1360 = vpack.c.b16 %v1322, %v1320
    %v1361 = vpack.c.b16 %v1323, %v1321
    %v1362 = vpack.c.b16 %v1326, %v1324
    %v1363 = vpack.c.b16 %v1327, %v1325
    %v1364 = vpack.c.b16 %v1330, %v1328
    %v1365 = vpack.c.b16 %v1331, %v1329
    %v1366 = vpack.c.b16 %v1334, %v1332
    %v1367 = vpack.c.b16 %v1335, %v1333
    %1400 = vmatpush.bf16.msra.mxu0 %v1350
    %1401 = vmatpush.bf16.msra.mxu0 %v1348
    %1402 = vmatpush.bf16.msra.mxu0 %v1346
    %1403 = vmatpush.bf16.msra.mxu0 %v1344
    %1404 = vmatpush.bf16.msra.mxu0 %v1342
    %1405 = vmatpush.bf16.msra.mxu0 %v1340
    %1406 = vmatpush.bf16.msra.mxu0 %v1338
    %1407 = vmatpush.bf16.msra.mxu0 %v1336
    %1408 = vmatmul.bf16.gmra.mxu0 %v1200
    %v1409 = vpop.f32.mrf.mxu0
    %v1410 = vadd.f32 %v1236, %v1409
    %v1411 = vpop.f32.mrf.mxu0
    %v1412 = vadd.f32 %v1236, %v1411
    %1413 = vdwg.mxu0
    %1414 = vmatpush.bf16.msra.mxu0 %v1366
    %1415 = vmatpush.bf16.msra.mxu0 %v1364
    %1416 = vmatpush.bf16.msra.mxu0 %v1362
    %1417 = vmatpush.bf16.msra.mxu0 %v1360
    %1418 = vmatpush.bf16.msra.mxu0 %v1358
    %1419 = vmatpush.bf16.msra.mxu0 %v1356
    %1420 = vmatpush.bf16.msra.mxu0 %v1354
    %1421 = vmatpush.bf16.msra.mxu0 %v1352
    %1422 = vmatmul.bf16.gmra.mxu0 %v1201
    %v1423 = vpop.f32.mrf.mxu0
    %v1424 = vadd.f32 %v1410, %v1423
    %v1425 = vpop.f32.mrf.mxu0
    %v1426 = vadd.f32 %v1412, %v1425
    %1427 = vdwg.mxu0
    %1428 = vmatpush.bf16.msra.mxu0 %v1351
    %1429 = vmatpush.bf16.msra.mxu0 %v1349
    %1430 = vmatpush.bf16.msra.mxu0 %v1347
    %1431 = vmatpush.bf16.msra.mxu0 %v1345
    %1432 = vmatpush.bf16.msra.mxu0 %v1343
    %1433 = vmatpush.bf16.msra.mxu0 %v1341
    %1434 = vmatpush.bf16.msra.mxu0 %v1339
    %1435 = vmatpush.bf16.msra.mxu0 %v1337
    %1436 = vmatmul.bf16.gmra.mxu0 %v1200
    %v1437 = vpop.f32.mrf.mxu0
    %v1438 = vadd.f32 %v1237, %v1437
    %v1439 = vpop.f32.mrf.mxu0
    %v1440 = vadd.f32 %v1237, %v1439
    %1441 = vdwg.mxu0
    %1442 = vmatpush.bf16.msra.mxu0 %v1367
    %1443 = vmatpush.bf16.msra.mxu0 %v1365
    %1444 = vmatpush.bf16.msra.mxu0 %v1363
    %1445 = vmatpush.bf16.msra.mxu0 %v1361
    %1446 = vmatpush.bf16.msra.mxu0 %v1359
    %1447 = vmatpush.bf16.msra.mxu0 %v1357
    %1448 = vmatpush.bf16.msra.mxu0 %v1355
    %1449 = vmatpush.bf16.msra.mxu0 %v1353
    %1450 = vmatmul.bf16.gmra.mxu0 %v1201
    %v1451 = vpop.f32.mrf.mxu0
    %v1452 = vadd.f32 %v1438, %v1451
    %v1453 = vpop.f32.mrf.mxu0
    %v1454 = vadd.f32 %v1440, %v1453
    %1455 = vdwg.mxu0
    %v1456 = vmax.f32 %v1424, 0.0
    %v1457 = vmax.f32 %v1452, 0.0
    %v1458 = vmax.f32 %v1426, 0.0
    %v1459 = vmax.f32 %v1454, 0.0
    %v1460 = vpack.c.bf16 %v1458, %v1456
    %v1461 = vpack.c.bf16 %v1459, %v1457
    %v1462 = vld [vmem:[#allocation10] sm:$0xf]
    %v1463 = vld [vmem:[#allocation10 + $0x4] sm:$0xf]
    %v1464 = vld [vmem:[#allocation10 + $0x8] sm:$0xf]
    %v1465 = vld [vmem:[#allocation10 + $0xc] sm:$0xf]
    %v1466 = vld [vmem:[#allocation10 + $0x10] sm:$0xf]
    %v1467 = vld [vmem:[#allocation10 + $0x14] sm:$0xf]
    %v1468 = vld [vmem:[#allocation10 + $0x18] sm:$0xf]
    %v1469 = vld [vmem:[#allocation10 + $0x1c] sm:$0xf]
    %v1470 = vld [vmem:[#allocation10 + $0x20] sm:$0xf]
    %v1471 = vld [vmem:[#allocation10 + $0x24] sm:$0xf]
    %v1472 = vld [vmem:[#allocation10 + $0x28] sm:$0xf]
    %v1473 = vld [vmem:[#allocation10 + $0x2c] sm:$0xf]
    %v1474 = vld [vmem:[#allocation10 + $0x30] sm:$0xf]
    %v1475 = vld [vmem:[#allocation10 + $0x34] sm:$0xf]
    %v1476 = vld [vmem:[#allocation10 + $0x38] sm:$0xf]
    %v1477 = vld [vmem:[#allocation10 + $0x3c] sm:$0xf]
    %v1478 = vld [vmem:[#allocation10 + $0x40] sm:$0xf]
    %v1479 = vld [vmem:[#allocation10 + $0x44] sm:$0xf]
    %v1480 = vld [vmem:[#allocation10 + $0x48] sm:$0xf]
    %v1481 = vld [vmem:[#allocation10 + $0x4c] sm:$0xf]
    %v1482 = vld [vmem:[#allocation10 + $0x50] sm:$0xf]
    %v1483 = vld [vmem:[#allocation10 + $0x54] sm:$0xf]
    %v1484 = vld [vmem:[#allocation10 + $0x58] sm:$0xf]
    %v1485 = vld [vmem:[#allocation10 + $0x5c] sm:$0xf]
    %v1486 = vld [vmem:[#allocation10 + $0x60] sm:$0xf]
    %v1487 = vld [vmem:[#allocation10 + $0x64] sm:$0xf]
    %v1488 = vld [vmem:[#allocation10 + $0x68] sm:$0xf]
    %v1489 = vld [vmem:[#allocation10 + $0x6c] sm:$0xf]
    %v1490 = vld [vmem:[#allocation10 + $0x70] sm:$0xf]
    %v1491 = vld [vmem:[#allocation10 + $0x74] sm:$0xf]
    %v1492 = vld [vmem:[#allocation10 + $0x78] sm:$0xf]
    %v1493 = vld [vmem:[#allocation10 + $0x7c] sm:$0xf]
    %v1494 = vld [vmem:[%s6] sm:$0x1]
    %v1496 = vperm.slane %v1494, 0
    %v1530 = vunpack.c.l.b16 %v1462
    %v1531 = vunpack.c.l.b16 %v1463
    %v1532 = vunpack.c.l.b16 %v1464
    %v1533 = vunpack.c.l.b16 %v1465
    %v1534 = vunpack.c.l.b16 %v1466
    %v1535 = vunpack.c.l.b16 %v1467
    %v1536 = vunpack.c.l.b16 %v1468
    %v1537 = vunpack.c.l.b16 %v1469
    %v1538 = vunpack.c.l.b16 %v1470
    %v1539 = vunpack.c.l.b16 %v1471
    %v1540 = vunpack.c.l.b16 %v1472
    %v1541 = vunpack.c.l.b16 %v1473
    %v1542 = vunpack.c.l.b16 %v1474
    %v1543 = vunpack.c.l.b16 %v1475
    %v1544 = vunpack.c.l.b16 %v1476
    %v1545 = vunpack.c.l.b16 %v1477
    %v1546 = vunpack.c.l.b16 %v1478
    %v1547 = vunpack.c.l.b16 %v1479
    %v1548 = vunpack.c.l.b16 %v1480
    %v1549 = vunpack.c.l.b16 %v1481
    %v1550 = vunpack.c.l.b16 %v1482
    %v1551 = vunpack.c.l.b16 %v1483
    %v1552 = vunpack.c.l.b16 %v1484
    %v1553 = vunpack.c.l.b16 %v1485
    %v1554 = vunpack.c.l.b16 %v1486
    %v1555 = vunpack.c.l.b16 %v1487
    %v1556 = vunpack.c.l.b16 %v1488
    %v1557 = vunpack.c.l.b16 %v1489
    %v1558 = vunpack.c.l.b16 %v1490
    %v1559 = vunpack.c.l.b16 %v1491
    %v1560 = vunpack.c.l.b16 %v1492
    %v1561 = vunpack.c.l.b16 %v1493
    %v1562 = vpack.c.b16 %v1531, %v1530
    %v1563 = vpack.c.b16 %v1533, %v1532
    %v1564 = vpack.c.b16 %v1535, %v1534
    %v1565 = vpack.c.b16 %v1537, %v1536
    %v1566 = vpack.c.b16 %v1539, %v1538
    %v1567 = vpack.c.b16 %v1541, %v1540
    %v1568 = vpack.c.b16 %v1543, %v1542
    %v1569 = vpack.c.b16 %v1545, %v1544
    %v1570 = vpack.c.b16 %v1547, %v1546
    %v1571 = vpack.c.b16 %v1549, %v1548
    %v1572 = vpack.c.b16 %v1551, %v1550
    %v1573 = vpack.c.b16 %v1553, %v1552
    %v1574 = vpack.c.b16 %v1555, %v1554
    %v1575 = vpack.c.b16 %v1557, %v1556
    %v1576 = vpack.c.b16 %v1559, %v1558
    %v1577 = vpack.c.b16 %v1561, %v1560
    %1594 = vmatpush.bf16.msra.mxu0 %v1569
    %1595 = vmatpush.bf16.msra.mxu0 %v1568
    %1596 = vmatpush.bf16.msra.mxu0 %v1567
    %1597 = vmatpush.bf16.msra.mxu0 %v1566
    %1598 = vmatpush.bf16.msra.mxu0 %v1565
    %1599 = vmatpush.bf16.msra.mxu0 %v1564
    %1600 = vmatpush.bf16.msra.mxu0 %v1563
    %1601 = vmatpush.bf16.msra.mxu0 %v1562
    %1602 = vmatmul.bf16.gmra.mxu0 %v1460
    %v1603 = vpop.f32.mrf.mxu0
    %v1604 = vadd.f32 %v1496, %v1603
    %v1605 = vpop.f32.mrf.mxu0
    %v1606 = vadd.f32 %v1496, %v1605
    %1607 = vdwg.mxu0
    %1608 = vmatpush.bf16.msra.mxu0 %v1577
    %1609 = vmatpush.bf16.msra.mxu0 %v1576
    %1610 = vmatpush.bf16.msra.mxu0 %v1575
    %1611 = vmatpush.bf16.msra.mxu0 %v1574
    %1612 = vmatpush.bf16.msra.mxu0 %v1573
    %1613 = vmatpush.bf16.msra.mxu0 %v1572
    %1614 = vmatpush.bf16.msra.mxu0 %v1571
    %1615 = vmatpush.bf16.msra.mxu0 %v1570
    %1616 = vmatmul.bf16.gmra.mxu0 %v1461
    %v1617 = vpop.f32.mrf.mxu0
    %v1618 = vadd.f32 %v1604, %v1617
    %v1619 = vpop.f32.mrf.mxu0
    %v1620 = vadd.f32 %v1606, %v1619
    %1621 = vdwg.mxu0
    %1622 = vst [vmem:[#allocation11] sm:$0xff] %v1618
    %1623 = vst [vmem:[#allocation11 + $0x8] sm:$0xff] %v1620
    // Predicated region
    $region50: #{tpu_custom_call.1} parent=1 // pred_check
      _
    $region51: #{tpu_custom_call.1} parent=1 // pred_check_branch
      %1625 = sbr.rel (0) target = $region53
    $region52: #{tpu_custom_call.1} parent=1 // pred_region
      %1627 = vsyncadd [#allocation4], 224
      %s1628 = sshll.u32 [#allocation11], 4
      %s1629 = int_to_ptr.vmem [resolvable:$true] %s1628
      %s1630 = sshll.u32 %s7, 4
      %s1631 = int_to_ptr.hbm [resolvable:$true] %s1630
      %1636 = dma.vmem_to_hbm [thread:$0]  %s1629, 32, %s1631, [#allocation4], 32, 32, 2
    $region53: #{tpu_custom_call.1} parent=1 // pred_fallthru
      _
    // Predicated region
    $region54: #{tpu_custom_call.1} parent=1 // pred_check
      _
    $region55: #{tpu_custom_call.1} parent=1 // pred_check_branch
      %1638 = sbr.rel (0) target = $region57
    $region56: #{tpu_custom_call.1} parent=1 // pred_region
      %1640 = dma.done [#allocation4], 256
    $region57: #{tpu_custom_call.1} parent=1 // pred_fallthru
      _
    %1641 = vsyncpa [#allocation3], 1
    %1642 = vsyncpa [#allocation6], 1
    %1643 = vsyncpa [#allocation9], 1
    %1644 = vsyncpa [#allocation4], 1

</llo_original>
